<compile_context>
chip_gen: v7x
topology: tpu7x:2x2x1
jax: 0.10.0
libtpu: 0.0.40
codegen_flags: <defaults>
</compile_context>

<pallas_src>
import jax
import jax.numpy as jnp
import numpy as np
from jax.experimental import pallas as pl
from jax.experimental.pallas import tpu as pltpu


def _gcn_kernel(x_ref, w1t_ref, b1_ref, w2t_ref, a_ref, o_ref):
    """One batch element per grid step.

    x_ref:   (N, Din)    bf16  per-batch activation tile
    w1t_ref: (Din, Dpad) bf16  W1^T zero-padded to a 128-lane multiple
    b1_ref:  (1, Dpad)   f32   bias zero-padded
    w2t_ref: (Din, Dpad) bf16  W2^T zero-padded
    a_ref:   (N, N)      bf16  dense_support (batch-invariant, resident)
    o_ref:   (N, Dpad)   f32   lane-dense output slab
    """
    x = x_ref[...]
    a = a_ref[...]

    # x_1 = lin(x): (N, Din) @ (Din, Dpad) on the MXU, f32 accumulation.
    x1 = jnp.dot(x, w1t_ref[...], preferred_element_type=jnp.float32) + b1_ref[...]

    din = x.shape[1]
    dpad = w2t_ref.shape[1]
    if dpad <= din:
        # Project first: the N^2 propagation runs over the narrower Dpad.
        x2 = jnp.dot(x, w2t_ref[...], preferred_element_type=jnp.float32)
        res = jnp.dot(a, x2.astype(a.dtype), preferred_element_type=jnp.float32)
    else:
        # Propagate first: the N^2 term runs over Din (< Dpad).
        ax = jnp.dot(a, x, preferred_element_type=jnp.float32)
        res = jnp.dot(ax.astype(w2t_ref.dtype), w2t_ref[...],
                      preferred_element_type=jnp.float32)

    o_ref[...] = (x1 + res).astype(o_ref.dtype)


def _round_up(v, m):
    return ((v + m - 1) // m) * m


def prepare_gcn_params(w1, b1, w2, dense_support):
    """One-time parameter prep, hoisted out of the per-forward path:
    transpose weights, zero-pad Dout up to a 128-lane multiple, and cast the
    MXU operands (weights, adjacency) to bfloat16."""
    dout, din = w1.shape
    dpad = _round_up(dout, 128)
    pad = dpad - dout
    w1t = jnp.pad(w1.T.astype(jnp.float32), ((0, 0), (0, pad))).astype(jnp.bfloat16)
    w2t = jnp.pad(w2.T.astype(jnp.float32), ((0, 0), (0, pad))).astype(jnp.bfloat16)
    b1p = jnp.pad(b1.astype(jnp.float32), (0, pad)).reshape(1, dpad)
    a_bf = dense_support.astype(jnp.bfloat16)
    return dict(w1t=w1t, b1=b1p, w2t=w2t, a=a_bf, dout=dout)


def graph_convolution(x, params):
    """x: (B, N, Din) float32; returns (B, N, Dout) float32."""
    B, N, Din = x.shape
    w1t, w2t, b1p, a = params["w1t"], params["w2t"], params["b1"], params["a"]
    dout = params["dout"]
    dpad = w1t.shape[1]

    # NOTE: block shapes (N, Din)/(N, N) require N % 8 == 0 (true for
    # pix2mesh vertex counts at demo scale).  For very large N, row-tile the
    # (N, N) adjacency with a (tn, N) BlockSpec + an extra grid axis and set
    # pltpu.CompilerParams(vmem_limit_bytes=...) (v5e 16 MiB scoped default,
    # v6e 32 MiB, v7x 64 MiB physical); bf16 A already doubles headroom.
    x_flat = x.reshape(B * N, Din).astype(jnp.bfloat16)

    out_flat = pl.pallas_call(
        _gcn_kernel,
        out_shape=jax.ShapeDtypeStruct((B * N, dpad), jnp.float32),
        grid=(B,),
        in_specs=[
            pl.BlockSpec((N, Din), lambda b: (b, 0)),      # per-batch x tile
            pl.BlockSpec((Din, dpad), lambda b: (0, 0)),   # W1^T (resident)
            pl.BlockSpec((1, dpad), lambda b: (0, 0)),     # bias (resident)
            pl.BlockSpec((Din, dpad), lambda b: (0, 0)),   # W2^T (resident)
            pl.BlockSpec((N, N), lambda b: (0, 0)),        # dense_support (resident)
        ],
        out_specs=pl.BlockSpec((N, dpad), lambda b: (b, 0)),
        compiler_params=pltpu.CompilerParams(
            dimension_semantics=("parallel",)),
    )(x_flat, w1t, b1p, w2t, a)

    # Slice the lane padding back off (keep Dout padded through a whole GCN
    # stack if this layer is chained, to stay lane-dense end to end).
    return out_flat.reshape(B, N, dpad)[:, :, :dout]


def xavier_uniform(key, shape):
    # Matches torch.nn.init.xavier_uniform_ for a (fan_out, fan_in) Linear weight.
    fan_out, fan_in = shape
    limit = float(np.sqrt(6.0 / (fan_in + fan_out)))
    return jax.random.uniform(key, shape, jnp.float32, -limit, limit)


if __name__ == "__main__":
    # Small shapes consistent with the module: batch=2, N=64 vertices,
    # input_dim=32, output_dim=16.
    B, N, Din, Dout = 2, 64, 32, 16

    key = jax.random.PRNGKey(0)
    k_x, k_w1, k_w2, k_a = jax.random.split(key, 4)

    x = jax.random.normal(k_x, (B, N, Din), jnp.float32)

    # Deterministic parameter init (synthetic; no checkpoint load).
    w1 = xavier_uniform(k_w1, (Dout, Din))
    b1 = jnp.zeros((Dout,), jnp.float32)          # constant_(bias, 0)
    w2 = xavier_uniform(k_w2, (Dout, Din))

    # Synthetic sparse-ish weighted adjacency with non-zero diagonal (densified).
    # TODO(synk): torch.sparse expanded-adjacency path (sparse=True, batch==12)
    # is mathematically identical to this dense matmul and is not implemented
    # separately.
    a_rand = jax.random.uniform(k_a, (N, N), jnp.float32)
    mask = (a_rand > 0.9).astype(jnp.float32)     # ~10% sparsity pattern
    dense_support = mask * a_rand + jnp.eye(N, dtype=jnp.float32)

    params = prepare_gcn_params(w1, b1, w2, dense_support)  # one-time prep
    out = graph_convolution(x, params)
    out = jax.block_until_ready(out)
    assert out.shape == (B, N, Dout)

    # Reference 1: mirrors the kernel's precision chain (bf16 operands,
    # f32 accumulation; Dpad > Din here, so propagate-then-project).
    x_bf = x.astype(jnp.bfloat16).astype(jnp.float32)
    a_bf = dense_support.astype(jnp.bfloat16).astype(jnp.float32)
    w1_bf = w1.astype(jnp.bfloat16).astype(jnp.float32)
    w2_bf = w2.astype(jnp.bfloat16).astype(jnp.float32)
    x1_ref = jnp.einsum("bnd,od->bno", x_bf, w1_bf) + b1
    ax_ref = jnp.einsum("nm,bmd->bnd", a_bf, x_bf)
    ax_ref = ax_ref.astype(jnp.bfloat16).astype(jnp.float32)
    res_ref = jnp.einsum("bnd,od->bno", ax_ref, w2_bf)
    ref = x1_ref + res_ref
    assert jnp.allclose(out, ref, atol=1e-3, rtol=1e-3)

    # Reference 2: plain f32 PyTorch-semantics math (loose tolerance: bf16
    # MXU operands introduce ~2^-8 relative rounding on the inputs).
    x1_f = jnp.einsum("bnd,od->bno", x, w1) + b1
    x2_f = jnp.einsum("bnd,od->bno", x, w2)
    ref_f = x1_f + jnp.einsum("nm,bmo->bno", dense_support, x2_f)
    assert jnp.allclose(out, ref_f, atol=0.5, rtol=0.05)

    print("KERNEL_OK")
</pallas_src>

<mosaic_0001>
module attributes {stable_mosaic.version = 11 : i64} {
  func.func @_gcn_kernel(%arg0: i32, %arg1: memref<64x32xbf16, #tpu.memory_space<vmem>>, %arg2: memref<32x128xbf16, #tpu.memory_space<vmem>>, %arg3: memref<1x128xf32, #tpu.memory_space<vmem>>, %arg4: memref<32x128xbf16, #tpu.memory_space<vmem>>, %arg5: memref<64x64xbf16, #tpu.memory_space<vmem>>, %arg6: memref<64x128xf32, #tpu.memory_space<vmem>>) attributes {dimension_semantics = [#tpu.dimension_semantics<parallel>], iteration_bounds = array<i64: 2>, scalar_prefetch = 0 : i64, scratch_operands = 0 : i64, tpu.core_type = #tpu.core_type<tc>, window_params = [{transform_indices = @transform_0, window_bounds = array<i64: 64, 32>}, {pipeline_mode = #tpu.pipeline_mode<synchronous>, transform_indices = @transform_1, window_bounds = array<i64: 32, 128>}, {pipeline_mode = #tpu.pipeline_mode<synchronous>, transform_indices = @transform_2, window_bounds = array<i64: 1, 128>}, {pipeline_mode = #tpu.pipeline_mode<synchronous>, transform_indices = @transform_3, window_bounds = array<i64: 32, 128>}, {pipeline_mode = #tpu.pipeline_mode<synchronous>, transform_indices = @transform_4, window_bounds = array<i64: 64, 64>}, {transform_indices = @transform_5, window_bounds = array<i64: 64, 128>}]} {
    %c0 = arith.constant 0 : index
    %c0_0 = arith.constant 0 : index
    %0 = vector.load %arg1[%c0, %c0_0] : memref<64x32xbf16, #tpu.memory_space<vmem>>, vector<64x32xbf16>
    %c0_1 = arith.constant 0 : index
    %c0_2 = arith.constant 0 : index
    %1 = vector.load %arg5[%c0_1, %c0_2] : memref<64x64xbf16, #tpu.memory_space<vmem>>, vector<64x64xbf16>
    %c0_3 = arith.constant 0 : index
    %c0_4 = arith.constant 0 : index
    %2 = vector.load %arg2[%c0_3, %c0_4] : memref<32x128xbf16, #tpu.memory_space<vmem>>, vector<32x128xbf16>
    %cst = arith.constant dense<0.000000e+00> : vector<64x128xf32>
    %3 = tpu.matmul %0, %2, %cst {dimension_numbers = #tpu.dot_dimension_numbers<[1], [0], [0], [1], [0, 0, 1, 1], [], []>} : vector<64x32xbf16>, vector<32x128xbf16>, vector<64x128xf32> -> vector<64x128xf32>
    %c0_5 = arith.constant 0 : index
    %c0_6 = arith.constant 0 : index
    %4 = vector.load %arg3[%c0_5, %c0_6] : memref<1x128xf32, #tpu.memory_space<vmem>>, vector<1x128xf32>
    %5 = vector.broadcast %4 : vector<1x128xf32> to vector<64x128xf32>
    %6 = arith.addf %3, %5 : vector<64x128xf32>
    %cst_7 = arith.constant dense<0.000000e+00> : vector<64x32xf32>
    %7 = tpu.matmul %1, %0, %cst_7 {dimension_numbers = #tpu.dot_dimension_numbers<[1], [0], [0], [1], [0, 0, 1, 1], [], []>} : vector<64x64xbf16>, vector<64x32xbf16>, vector<64x32xf32> -> vector<64x32xf32>
    %8 = arith.truncf %7 : vector<64x32xf32> to vector<64x32xbf16>
    %c0_8 = arith.constant 0 : index
    %c0_9 = arith.constant 0 : index
    %9 = vector.load %arg4[%c0_8, %c0_9] : memref<32x128xbf16, #tpu.memory_space<vmem>>, vector<32x128xbf16>
    %cst_10 = arith.constant dense<0.000000e+00> : vector<64x128xf32>
    %10 = tpu.matmul %8, %9, %cst_10 {dimension_numbers = #tpu.dot_dimension_numbers<[1], [0], [0], [1], [0, 0, 1, 1], [], []>} : vector<64x32xbf16>, vector<32x128xbf16>, vector<64x128xf32> -> vector<64x128xf32>
    %11 = arith.addf %6, %10 : vector<64x128xf32>
    %c0_11 = arith.constant 0 : index
    %c0_12 = arith.constant 0 : index
    %12 = vector.load %arg6[%c0_11, %c0_12] : memref<64x128xf32, #tpu.memory_space<vmem>>, vector<64x128xf32>
    tpu.vector_store %arg6[%c0_11, %c0_12], %11 {strides = array<i32>} : memref<64x128xf32, #tpu.memory_space<vmem>>, vector<64x128xf32>,
    return
  }
  func.func @transform_0(%arg0: i32) -> (i32, i32) {
    %c0_i32 = arith.constant 0 : i32
    %c0_i32_0 = arith.constant 0 : i32
    return %arg0, %c0_i32 : i32, i32
  }
  func.func @transform_1(%arg0: i32) -> (i32, i32) {
    %c0_i32 = arith.constant 0 : i32
    %c0_i32_0 = arith.constant 0 : i32
    %c0_i32_1 = arith.constant 0 : i32
    return %c0_i32, %c0_i32_0 : i32, i32
  }
  func.func @transform_2(%arg0: i32) -> (i32, i32) {
    %c0_i32 = arith.constant 0 : i32
    %c0_i32_0 = arith.constant 0 : i32
    %c0_i32_1 = arith.constant 0 : i32
    return %c0_i32, %c0_i32_0 : i32, i32
  }
  func.func @transform_3(%arg0: i32) -> (i32, i32) {
    %c0_i32 = arith.constant 0 : i32
    %c0_i32_0 = arith.constant 0 : i32
    %c0_i32_1 = arith.constant 0 : i32
    return %c0_i32, %c0_i32_0 : i32, i32
  }
  func.func @transform_4(%arg0: i32) -> (i32, i32) {
    %c0_i32 = arith.constant 0 : i32
    %c0_i32_0 = arith.constant 0 : i32
    %c0_i32_1 = arith.constant 0 : i32
    return %c0_i32, %c0_i32_0 : i32, i32
  }
  func.func @transform_5(%arg0: i32) -> (i32, i32) {
    %c0_i32 = arith.constant 0 : i32
    %c0_i32_0 = arith.constant 0 : i32
    return %arg0, %c0_i32 : i32, i32
  }
}

</mosaic_0001>

<llo_original>
// kernel: tpu_custom_call.1
$region0: #{tpu_custom_call.1}
  #allocation0 [shape = 'u32[]', space=smem, size = 0x4, offset = 0x4, fixed_abs, tag = 'smem constant byte address 0x4 - core index']
  #allocation1 [shape = 'u32[144,128]{1,0:T(1,128)}', space=vmem, size = 0x12000, scoped, tag = 'internal scratch']
  %s0 = inlined_call_operand.vmem [shape: bf16[128,32], index: 0, kind: input, shape index: {}]
  %s1 = inlined_call_operand.vmem [shape: bf16[32,128], index: 1, kind: input, shape index: {}]
  %s2 = inlined_call_operand.vmem [shape: f32[1,128], index: 2, kind: input, shape index: {}]
  %s3 = inlined_call_operand.vmem [shape: bf16[32,128], index: 3, kind: input, shape index: {}]
  %s4 = inlined_call_operand.vmem [shape: bf16[64,64], index: 4, kind: input, shape index: {}]
  %s5 = inlined_call_operand.hbm [shape: f32[128,128], index: 5, kind: output, shape index: {}]
  %s6 = sld [smem:[#allocation0]]
  $region53: #{tpu_custom_call.1} parent=0
    _
  %s8 = ssub.s32 1, %s6
  %s9 = scalar_select 0, %s8, %s6
  $region1: #{tpu_custom_call.1} parent=0
    #allocation2 [shape = 'u8[65536]{0}', space=vmem, size = 0x10000, scoped, tag = 'output window, operand 0']
    #allocation3 [shape = 's32[2]{0}', space=sflag, size = 0x8, scoped, tag = 'scoped memory for tpu_custom_call.1']
    %10 = vsyncpa [#allocation3], 0
    %s11 = scalar_lea.sflag [#allocation3], 1
    %12 = vsyncpa %s11, 0
    loop: start=0, step=1, limit=4
    $region2: #{tpu_custom_call.1} parent=1 // loop_pre_header
      _
    $region3: #{tpu_custom_call.1} parent=1 // loop_header
      %s14 = sphi 0, %s18
      %p15 = scmp.ge.s32.totalorder %s14, 4
      %s24 = sphi 0, %s26
      %s27 = sphi 0, %s24
      %s28 = sphi 0, %s27
      %s44 = sphi 0, %s28
      %s48 = sphi 0, %s48
      %s50 = sphi 0, %s48
      %s51 = sphi 0, %s50
      %s65 = sphi 0, %s51
      %s69 = sphi 0, %s69
      %s71 = sphi 0, %s69
      %s72 = sphi 0, %s71
      %s86 = sphi 0, %s72
      %s90 = sphi 0, %s90
      %s92 = sphi 0, %s90
      %s93 = sphi 0, %s92
      %s107 = sphi 0, %s93
      %s111 = sphi 0, %s111
      %s113 = sphi 0, %s111
      %s114 = sphi 0, %s113
      %s128 = sphi 0, %s114
      %s134 = sphi 0, %s136
      %s137 = sphi 0, %s134
      %s138 = sphi 0, %s137
      %s154 = sphi 0, %s138
    $region4: #{tpu_custom_call.1} parent=1 // loop_header_branch
      %17 = sbr.rel (%p15) target = $region8
    $region5: #{tpu_custom_call.1} parent=1 // loop_body
      %s19 = ssub.s32 %s14, 1
      %s20 = ssub.s32 %s14, 2
      %s21 = sadd.s32 %s14, 1
      %s22 = ssub.s32 %s14, %s21
      %p23 = scmp.eq.s32.totalorder %s22, 0
      %s25 = sadd.s32 %s24, 1
      %s26 = scalar_select %p23, %s24, %s25
      %p29 = pneg %p23
      %p30 = scmp.eq.s32.totalorder %s14, 1
      %p31 = por %p29, %p30
      %p32 = scmp.ne.s32.totalorder %s24, %s27
      %p33 = scmp.eq.s32.totalorder %s14, 0
      %p34 = por %p32, %p33
      %p35 = scmp.ne.s32.totalorder %s24, %s27
      %p36 = scmp.eq.s32.totalorder %s19, 1
      %p37 = por %p35, %p36
      %p38 = scmp.ne.s32.totalorder %s27, %s28
      %p39 = scmp.eq.s32.totalorder %s19, 0
      %p40 = por %p38, %p39
      %p41 = scmp.ne.s32.totalorder %s27, %s28
      %p42 = scmp.eq.s32.totalorder %s20, 1
      %p43 = por %p41, %p42
      %p45 = scmp.ne.s32.totalorder %s28, %s44
      %p46 = scmp.eq.s32.totalorder %s20, 0
      %p47 = por %p45, %p46
      %s49 = sadd.s32 %s48, 1
      %p52 = scmp.eq.s32.totalorder %s14, 1
      %p53 = scmp.ne.s32.totalorder %s48, %s50
      %p54 = scmp.eq.s32.totalorder %s14, 0
      %p55 = por %p53, %p54
      %p56 = scmp.ne.s32.totalorder %s48, %s50
      %p57 = scmp.eq.s32.totalorder %s19, 1
      %p58 = por %p56, %p57
      %p59 = scmp.ne.s32.totalorder %s50, %s51
      %p60 = scmp.eq.s32.totalorder %s19, 0
      %p61 = por %p59, %p60
      %p62 = scmp.ne.s32.totalorder %s50, %s51
      %p63 = scmp.eq.s32.totalorder %s20, 1
      %p64 = por %p62, %p63
      %p66 = scmp.ne.s32.totalorder %s51, %s65
      %p67 = scmp.eq.s32.totalorder %s20, 0
      %p68 = por %p66, %p67
      %s70 = sadd.s32 %s69, 1
      %p73 = scmp.eq.s32.totalorder %s14, 1
      %p74 = scmp.ne.s32.totalorder %s69, %s71
      %p75 = scmp.eq.s32.totalorder %s14, 0
      %p76 = por %p74, %p75
      %p77 = scmp.ne.s32.totalorder %s69, %s71
      %p78 = scmp.eq.s32.totalorder %s19, 1
      %p79 = por %p77, %p78
      %p80 = scmp.ne.s32.totalorder %s71, %s72
      %p81 = scmp.eq.s32.totalorder %s19, 0
      %p82 = por %p80, %p81
      %p83 = scmp.ne.s32.totalorder %s71, %s72
      %p84 = scmp.eq.s32.totalorder %s20, 1
      %p85 = por %p83, %p84
      %p87 = scmp.ne.s32.totalorder %s72, %s86
      %p88 = scmp.eq.s32.totalorder %s20, 0
      %p89 = por %p87, %p88
      %s91 = sadd.s32 %s90, 1
      %p94 = scmp.eq.s32.totalorder %s14, 1
      %p95 = scmp.ne.s32.totalorder %s90, %s92
      %p96 = scmp.eq.s32.totalorder %s14, 0
      %p97 = por %p95, %p96
      %p98 = scmp.ne.s32.totalorder %s90, %s92
      %p99 = scmp.eq.s32.totalorder %s19, 1
      %p100 = por %p98, %p99
      %p101 = scmp.ne.s32.totalorder %s92, %s93
      %p102 = scmp.eq.s32.totalorder %s19, 0
      %p103 = por %p101, %p102
      %p104 = scmp.ne.s32.totalorder %s92, %s93
      %p105 = scmp.eq.s32.totalorder %s20, 1
      %p106 = por %p104, %p105
      %p108 = scmp.ne.s32.totalorder %s93, %s107
      %p109 = scmp.eq.s32.totalorder %s20, 0
      %p110 = por %p108, %p109
      %s112 = sadd.s32 %s111, 1
      %p115 = scmp.eq.s32.totalorder %s14, 1
      %p116 = scmp.ne.s32.totalorder %s111, %s113
      %p117 = scmp.eq.s32.totalorder %s14, 0
      %p118 = por %p116, %p117
      %p119 = scmp.ne.s32.totalorder %s111, %s113
      %p120 = scmp.eq.s32.totalorder %s19, 1
      %p121 = por %p119, %p120
      %p122 = scmp.ne.s32.totalorder %s113, %s114
      %p123 = scmp.eq.s32.totalorder %s19, 0
      %p124 = por %p122, %p123
      %p125 = scmp.ne.s32.totalorder %s113, %s114
      %p126 = scmp.eq.s32.totalorder %s20, 1
      %p127 = por %p125, %p126
      %p129 = scmp.ne.s32.totalorder %s114, %s128
      %p130 = scmp.eq.s32.totalorder %s20, 0
      %p131 = por %p129, %p130
      %s132 = ssub.s32 %s14, %s21
      %p133 = scmp.eq.s32.totalorder %s132, 0
      %s135 = sadd.s32 %s134, 1
      %s136 = scalar_select %p133, %s134, %s135
      %p139 = pneg %p133
      %p140 = scmp.eq.s32.totalorder %s14, 1
      %p141 = por %p139, %p140
      %p142 = scmp.ne.s32.totalorder %s134, %s137
      %p143 = scmp.eq.s32.totalorder %s14, 0
      %p144 = por %p142, %p143
      %p145 = scmp.ne.s32.totalorder %s134, %s137
      %p146 = scmp.eq.s32.totalorder %s19, 1
      %p147 = por %p145, %p146
      %p148 = scmp.ne.s32.totalorder %s137, %s138
      %p149 = scmp.eq.s32.totalorder %s19, 0
      %p150 = por %p148, %p149
      %p151 = scmp.ne.s32.totalorder %s137, %s138
      %p152 = scmp.eq.s32.totalorder %s20, 1
      %p153 = por %p151, %p152
      %p155 = scmp.ne.s32.totalorder %s138, %s154
      %p156 = scmp.eq.s32.totalorder %s20, 0
      %p157 = por %p155, %p156
      %p158 = scmp.le.s32.totalorder 1, %s14
      %p159 = scmp.lt.s32.totalorder %s14, 3
      %p160 = pnand %p158, %p159
      %p161 = pneg %p160
      // Predicated region
      $region9: #{tpu_custom_call.1} parent=5 // pred_check
        _
      $region10: #{tpu_custom_call.1} parent=5 // pred_check_branch
        %163 = sbr.rel (%p160) target = $region12
      $region11: #{tpu_custom_call.1} parent=5 // pred_region
        %s164 = ssub.s32 %s14, 1
        // Predicated region
        $region13: #{tpu_custom_call.1} parent=11 // pred_check
          %p165 = pneg %p61
        $region14: #{tpu_custom_call.1} parent=11 // pred_check_branch
          %167 = sbr.rel (%p165) target = $region16
        $region15: #{tpu_custom_call.1} parent=11 // pred_region
          _
        $region16: #{tpu_custom_call.1} parent=11 // pred_fallthru
          _
        // Predicated region
        $region17: #{tpu_custom_call.1} parent=11 // pred_check
          %p168 = pneg %p82
        $region18: #{tpu_custom_call.1} parent=11 // pred_check_branch
          %170 = sbr.rel (%p168) target = $region20
        $region19: #{tpu_custom_call.1} parent=11 // pred_region
          _
        $region20: #{tpu_custom_call.1} parent=11 // pred_fallthru
          _
        // Predicated region
        $region21: #{tpu_custom_call.1} parent=11 // pred_check
          %p171 = pneg %p103
        $region22: #{tpu_custom_call.1} parent=11 // pred_check_branch
          %173 = sbr.rel (%p171) target = $region24
        $region23: #{tpu_custom_call.1} parent=11 // pred_region
          _
        $region24: #{tpu_custom_call.1} parent=11 // pred_fallthru
          _
        // Predicated region
        $region25: #{tpu_custom_call.1} parent=11 // pred_check
          %p174 = pneg %p124
        $region26: #{tpu_custom_call.1} parent=11 // pred_check_branch
          %176 = sbr.rel (%p174) target = $region28
        $region27: #{tpu_custom_call.1} parent=11 // pred_region
          _
        $region28: #{tpu_custom_call.1} parent=11 // pred_fallthru
          _
      $region12: #{tpu_custom_call.1} parent=5 // pred_fallthru
        _
      %p177 = scmp.lt.s32.totalorder %s14, 2
      // Predicated region
      $region29: #{tpu_custom_call.1} parent=5 // pred_check
        %p178 = pneg %p177
      $region30: #{tpu_custom_call.1} parent=5 // pred_check_branch
        %180 = sbr.rel (%p178) target = $region32
      $region31: #{tpu_custom_call.1} parent=5 // pred_region
        // Predicated region
        $region33: #{tpu_custom_call.1} parent=31 // pred_check
          %p181 = pneg %p34
        $region34: #{tpu_custom_call.1} parent=31 // pred_check_branch
          %183 = sbr.rel (%p181) target = $region36
        $region35: #{tpu_custom_call.1} parent=31 // pred_region
          %s184 = smul.u32 8, %s14
          %p185 = scmp.lt.s32.totalorder %s184, 15
          %s186 = scalar_select %p185, %s184, 15
          %s187 = smul.addr %s186, 4
          %s188 = scalar_lea.vmem %s0, %s187
          %s189 = smul.u32 8, %s14
        $region36: #{tpu_custom_call.1} parent=31 // pred_fallthru
          _
      $region32: #{tpu_custom_call.1} parent=5 // pred_fallthru
        _
      %p190 = scmp.le.s32.totalorder 1, %s14
      %p191 = scmp.lt.s32.totalorder %s14, 3
      %p192 = pnand %p190, %p191
      %p193 = pneg %p192
      // Predicated region
      $region37: #{tpu_custom_call.1} parent=5 // pred_check
        _
      $region38: #{tpu_custom_call.1} parent=5 // pred_check_branch
        %195 = sbr.rel (%p192) target = $region40
      $region39: #{tpu_custom_call.1} parent=5 // pred_region
        %s196 = ssub.s32 %s14, 1
        %s197 = smul.u32 8, %s19
        %p198 = scmp.lt.s32.totalorder %s197, 15
        %s199 = scalar_select %p198, %s197, 15
        %s200 = smul.addr %s199, 4
        %s201 = scalar_lea.vmem %s0, %s200
        %p202 = pneg %p40
        %p203 = pneg %p37
        %p204 = pneg %p61
        %p205 = pneg %p58
        %p206 = pneg %p82
        %p207 = pneg %p79
        %p208 = pneg %p103
        %p209 = pneg %p100
        %p210 = pneg %p124
        %p211 = pneg %p121
        %p212 = pneg %p150
        %p213 = pneg %p147
        %s214 = sand.u32 %s137, 1
        %s215 = scalar_lea.sflag [#allocation3], %s214
        %s216 = sand.u32 %s137, 1
        %s217 = smul.addr %s216, 64
        %s218 = scalar_lea.vmem [#allocation2], %s217
        %s219 = smul.u32 8, %s19
        %p220 = scmp.lt.s32.totalorder %s219, 15
        %s221 = scalar_select %p220, %s219, 15
        %s222 = smul.addr %s221, 4
        %s223 = scalar_lea.vmem %s0, %s222
        %s224 = smul.u32 8, %s19
        %s225 = smul.u32 8, %s19
        %v227 = vld [vmem:[%s223] sm:$0xf]
        %v228 = vld [vmem:[%s223 + $0x4] sm:$0xf]
        %v229 = vld [vmem:[%s223 + $0x8] sm:$0xf]
        %v230 = vld [vmem:[%s223 + $0xc] sm:$0xf]
        %v231 = vld [vmem:[%s223 + $0x10] sm:$0xf]
        %v232 = vld [vmem:[%s223 + $0x14] sm:$0xf]
        %v233 = vld [vmem:[%s223 + $0x18] sm:$0xf]
        %v234 = vld [vmem:[%s223 + $0x1c] sm:$0xf]
        %v235 = vld [vmem:[%s4] sm:$0xf]
        %v236 = vld [vmem:[%s4 + $0x4] sm:$0xf]
        %v237 = vld [vmem:[%s4 + $0x8] sm:$0xf]
        %v238 = vld [vmem:[%s4 + $0xc] sm:$0xf]
        %v239 = vld [vmem:[%s4 + $0x10] sm:$0xf]
        %v240 = vld [vmem:[%s4 + $0x14] sm:$0xf]
        %v241 = vld [vmem:[%s4 + $0x18] sm:$0xf]
        %v242 = vld [vmem:[%s4 + $0x1c] sm:$0xf]
        %v243 = vld [vmem:[%s1] sm:$0xf]
        %v244 = vld [vmem:[%s1 + $0x4] sm:$0xf]
        %v245 = vld [vmem:[%s1 + $0x8] sm:$0xf]
        %v246 = vld [vmem:[%s1 + $0xc] sm:$0xf]
        %v247 = vld [vmem:[%s2] sm:$0x1]
        %v249 = vlaneseq
        %v250 = vshrl.u32 %v249, 7
        %v251 = vsub.s32 0, %v250
        %v252 = vrot.slane %v247, %v251
        %v262 = vunpack.c.l.b16 %v227
        %v263 = vunpack.c.l.b16 %v228
        %v264 = vunpack.c.l.b16 %v229
        %v265 = vunpack.c.l.b16 %v230
        %v266 = vunpack.c.l.b16 %v231
        %v267 = vunpack.c.l.b16 %v232
        %v268 = vunpack.c.l.b16 %v233
        %v269 = vunpack.c.l.b16 %v234
        %v270 = vpack.c.b16 %v263, %v262
        %v271 = vpack.c.b16 %v265, %v264
        %v272 = vpack.c.b16 %v267, %v266
        %v273 = vpack.c.b16 %v269, %v268
        %v278 = vunpack.c.l.b16 %v243
        %v279 = vunpack.c.l.b16 %v244
        %v280 = vunpack.c.l.b16 %v245
        %v281 = vunpack.c.l.b16 %v246
        %v282 = vpack.c.b16 %v279, %v278
        %v283 = vpack.c.b16 %v281, %v280
        %vm286 = vcmask 261120
        %v288 = vsel %vm286, %v270, 0
        %v291 = vsel %vm286, %v271, 0
        %v294 = vsel %vm286, %v272, 0
        %v297 = vsel %vm286, %v273, 0
        %299 = vmatprep.subr.bf16.mxu0 0
        %300 = vmatpush1.bf16.msra.mxu0 %v282
        %301 = vmatprep.subr.bf16.mxu0 0
        %302 = vmatpush1.bf16.msra.mxu0 %v283
        %303 = vmatprep.subr.bf16.mxu0 0
        %304 = vmatpush1.bf16.msra.mxu0 0
        %305 = vmatprep.subr.bf16.mxu0 0
        %306 = vmatpush1.bf16.msra.mxu0 0
        %307 = vmatprep.subr.bf16.mxu0 0
        %308 = vmatpush1.bf16.msra.mxu0 0
        %309 = vmatprep.subr.bf16.mxu0 0
        %310 = vmatpush1.bf16.msra.mxu0 0
        %311 = vmatprep.subr.bf16.mxu0 0
        %312 = vmatpush1.bf16.msra.mxu0 0
        %313 = vmatprep.subr.bf16.mxu0 0
        %314 = vmatpush1.bf16.msra.mxu0 0
        %315 = vmatprep.subr.bf16.mxu0 0
        %316 = vmatpush1.bf16.msra.mxu0 0
        %317 = vmatprep.subr.bf16.mxu0 0
        %318 = vmatpush1.bf16.msra.mxu0 0
        %319 = vmatprep.subr.bf16.mxu0 0
        %320 = vmatpush1.bf16.msra.mxu0 0
        %321 = vmatprep.subr.bf16.mxu0 0
        %322 = vmatpush1.bf16.msra.mxu0 0
        %323 = vmatprep.subr.bf16.mxu0 0
        %324 = vmatpush1.bf16.msra.mxu0 0
        %325 = vmatprep.subr.bf16.mxu0 0
        %326 = vmatpush1.bf16.msra.mxu0 0
        %327 = vmatprep.subr.bf16.mxu0 0
        %328 = vmatpush1.bf16.msra.mxu0 0
        %329 = vmatprep.subr.bf16.mxu0 0
        %330 = vmatpush1.bf16.msra.mxu0 0
        %331 = vmatprep.mubr.bf16.mxu0 0
        %332 = vmatmul.mubr.bf16.gmra.mrb[0].mxu0 %v288
        %v333 = vpop.f32.mrb[0].mxu0
        %v334 = vadd.f32 %v252, %v333
        %v335 = vpop.f32.mrb[0].mxu0
        %v336 = vpop.f32.mrb[0].mxu0
        %v337 = vadd.f32 %v252, %v336
        %v338 = vpop.f32.mrb[0].mxu0
        %339 = vmatprep.mubr.bf16.mxu0 0
        %340 = vmatmul.mubr.bf16.gmra.mrb[0].mxu0 %v291
        %v341 = vpop.f32.mrb[0].mxu0
        %v342 = vadd.f32 %v252, %v341
        %v343 = vpop.f32.mrb[0].mxu0
        %v344 = vpop.f32.mrb[0].mxu0
        %v345 = vadd.f32 %v252, %v344
        %v346 = vpop.f32.mrb[0].mxu0
        %347 = vmatprep.mubr.bf16.mxu0 0
        %348 = vmatmul.mubr.bf16.gmra.mrb[0].mxu0 %v294
        %v349 = vpop.f32.mrb[0].mxu0
        %v350 = vadd.f32 %v252, %v349
        %v351 = vpop.f32.mrb[0].mxu0
        %v352 = vpop.f32.mrb[0].mxu0
        %v353 = vadd.f32 %v252, %v352
        %v354 = vpop.f32.mrb[0].mxu0
        %355 = vmatprep.mubr.bf16.mxu0 0
        %356 = vmatmul.mubr.bf16.gmra.mrb[0].mxu0 %v297
        %v357 = vpop.f32.mrb[0].mxu0
        %v358 = vadd.f32 %v252, %v357
        %v359 = vpop.f32.mrb[0].mxu0
        %v360 = vpop.f32.mrb[0].mxu0
        %v361 = vadd.f32 %v252, %v360
        %v362 = vpop.f32.mrb[0].mxu0
        %363 = vdwg.mxu0
        %v372 = vunpack.c.l.b16 %v235
        %v373 = vunpack.c.l.b16 %v236
        %v374 = vunpack.c.l.b16 %v237
        %v375 = vunpack.c.l.b16 %v238
        %v376 = vunpack.c.l.b16 %v239
        %v377 = vunpack.c.l.b16 %v240
        %v378 = vunpack.c.l.b16 %v241
        %v379 = vunpack.c.l.b16 %v242
        %v380 = vpack.c.b16 %v373, %v372
        %v381 = vpack.c.b16 %v375, %v374
        %v382 = vpack.c.b16 %v377, %v376
        %v383 = vpack.c.b16 %v379, %v378
        %vm388 = vcmask 523264
        %v390 = vsel %vm388, %v380, 0
        %v393 = vsel %vm388, %v381, 0
        %v396 = vsel %vm388, %v382, 0
        %v399 = vsel %vm388, %v383, 0
        %401 = vmatprep.subr.bf16.mxu0 0
        %402 = vmatpush1.bf16.msra.mxu0 %v270
        %403 = vmatprep.subr.bf16.mxu0 0
        %404 = vmatpush1.bf16.msra.mxu0 %v271
        %405 = vmatprep.subr.bf16.mxu0 0
        %406 = vmatpush1.bf16.msra.mxu0 %v272
        %407 = vmatprep.subr.bf16.mxu0 0
        %408 = vmatpush1.bf16.msra.mxu0 %v273
        %409 = vmatprep.subr.bf16.mxu0 0
        %410 = vmatpush1.bf16.msra.mxu0 0
        %411 = vmatprep.subr.bf16.mxu0 0
        %412 = vmatpush1.bf16.msra.mxu0 0
        %413 = vmatprep.subr.bf16.mxu0 0
        %414 = vmatpush1.bf16.msra.mxu0 0
        %415 = vmatprep.subr.bf16.mxu0 0
        %416 = vmatpush1.bf16.msra.mxu0 0
        %417 = vmatprep.subr.bf16.mxu0 0
        %418 = vmatpush1.bf16.msra.mxu0 0
        %419 = vmatprep.subr.bf16.mxu0 0
        %420 = vmatpush1.bf16.msra.mxu0 0
        %421 = vmatprep.subr.bf16.mxu0 0
        %422 = vmatpush1.bf16.msra.mxu0 0
        %423 = vmatprep.subr.bf16.mxu0 0
        %424 = vmatpush1.bf16.msra.mxu0 0
        %425 = vmatprep.subr.bf16.mxu0 0
        %426 = vmatpush1.bf16.msra.mxu0 0
        %427 = vmatprep.subr.bf16.mxu0 0
        %428 = vmatpush1.bf16.msra.mxu0 0
        %429 = vmatprep.subr.bf16.mxu0 0
        %430 = vmatpush1.bf16.msra.mxu0 0
        %431 = vmatprep.subr.bf16.mxu0 0
        %432 = vmatpush1.bf16.msra.mxu0 0
        %433 = vmatprep.mubr.bf16.mxu0 0
        %434 = vmatmul.mubr.bf16.gmra.mrb[0].mxu0 %v390
        %v435 = vpop.f32.mrb[0].mxu0
        %v436 = vadd.f32 0.0, %v435
        %v437 = vpop.f32.mrb[0].mxu0
        %v438 = vpop.f32.mrb[0].mxu0
        %v439 = vadd.f32 0.0, %v438
        %v440 = vpop.f32.mrb[0].mxu0
        %441 = vmatprep.mubr.bf16.mxu0 0
        %442 = vmatmul.mubr.bf16.gmra.mrb[0].mxu0 %v393
        %v443 = vpop.f32.mrb[0].mxu0
        %v444 = vadd.f32 0.0, %v443
        %v445 = vpop.f32.mrb[0].mxu0
        %v446 = vpop.f32.mrb[0].mxu0
        %v447 = vadd.f32 0.0, %v446
        %v448 = vpop.f32.mrb[0].mxu0
        %449 = vmatprep.mubr.bf16.mxu0 0
        %450 = vmatmul.mubr.bf16.gmra.mrb[0].mxu0 %v396
        %v451 = vpop.f32.mrb[0].mxu0
        %v452 = vadd.f32 0.0, %v451
        %v453 = vpop.f32.mrb[0].mxu0
        %v454 = vpop.f32.mrb[0].mxu0
        %v455 = vadd.f32 0.0, %v454
        %v456 = vpop.f32.mrb[0].mxu0
        %457 = vmatprep.mubr.bf16.mxu0 0
        %458 = vmatmul.mubr.bf16.gmra.mrb[0].mxu0 %v399
        %v459 = vpop.f32.mrb[0].mxu0
        %v460 = vadd.f32 0.0, %v459
        %v461 = vpop.f32.mrb[0].mxu0
        %v462 = vpop.f32.mrb[0].mxu0
        %v463 = vadd.f32 0.0, %v462
        %v464 = vpop.f32.mrb[0].mxu0
        %465 = vdwg.mxu0
        %v466 = vpack.c.bf16 %v439, %v436
        %v467 = vpack.c.bf16 %v447, %v444
        %v468 = vpack.c.bf16 %v455, %v452
        %v469 = vpack.c.bf16 %v463, %v460
        %v470 = vld [vmem:[%s3] sm:$0xf]
        %v471 = vld [vmem:[%s3 + $0x4] sm:$0xf]
        %v472 = vld [vmem:[%s3 + $0x8] sm:$0xf]
        %v473 = vld [vmem:[%s3 + $0xc] sm:$0xf]
        %v478 = vunpack.c.l.b16 %v470
        %v479 = vunpack.c.l.b16 %v471
        %v480 = vunpack.c.l.b16 %v472
        %v481 = vunpack.c.l.b16 %v473
        %v482 = vpack.c.b16 %v479, %v478
        %v483 = vpack.c.b16 %v481, %v480
        %v487 = vsel %vm286, %v466, 0
        %v490 = vsel %vm286, %v467, 0
        %v493 = vsel %vm286, %v468, 0
        %v496 = vsel %vm286, %v469, 0
        %498 = vmatprep.subr.bf16.mxu0 0
        %499 = vmatpush1.bf16.msra.mxu0 %v482
        %500 = vmatprep.subr.bf16.mxu0 0
        %501 = vmatpush1.bf16.msra.mxu0 %v483
        %502 = vmatprep.subr.bf16.mxu0 0
        %503 = vmatpush1.bf16.msra.mxu0 0
        %504 = vmatprep.subr.bf16.mxu0 0
        %505 = vmatpush1.bf16.msra.mxu0 0
        %506 = vmatprep.subr.bf16.mxu0 0
        %507 = vmatpush1.bf16.msra.mxu0 0
        %508 = vmatprep.subr.bf16.mxu0 0
        %509 = vmatpush1.bf16.msra.mxu0 0
        %510 = vmatprep.subr.bf16.mxu0 0
        %511 = vmatpush1.bf16.msra.mxu0 0
        %512 = vmatprep.subr.bf16.mxu0 0
        %513 = vmatpush1.bf16.msra.mxu0 0
        %514 = vmatprep.subr.bf16.mxu0 0
        %515 = vmatpush1.bf16.msra.mxu0 0
        %516 = vmatprep.subr.bf16.mxu0 0
        %517 = vmatpush1.bf16.msra.mxu0 0
        %518 = vmatprep.subr.bf16.mxu0 0
        %519 = vmatpush1.bf16.msra.mxu0 0
        %520 = vmatprep.subr.bf16.mxu0 0
        %521 = vmatpush1.bf16.msra.mxu0 0
        %522 = vmatprep.subr.bf16.mxu0 0
        %523 = vmatpush1.bf16.msra.mxu0 0
        %524 = vmatprep.subr.bf16.mxu0 0
        %525 = vmatpush1.bf16.msra.mxu0 0
        %526 = vmatprep.subr.bf16.mxu0 0
        %527 = vmatpush1.bf16.msra.mxu0 0
        %528 = vmatprep.subr.bf16.mxu0 0
        %529 = vmatpush1.bf16.msra.mxu0 0
        %530 = vmatprep.mubr.bf16.mxu0 0
        %531 = vmatmul.mubr.bf16.gmra.mrb[0].mxu0 %v487
        %v532 = vpop.f32.mrb[0].mxu0
        %v533 = vadd.f32 0.0, %v532
        %v534 = vpop.f32.mrb[0].mxu0
        %v535 = vpop.f32.mrb[0].mxu0
        %v536 = vadd.f32 0.0, %v535
        %v537 = vpop.f32.mrb[0].mxu0
        %538 = vmatprep.mubr.bf16.mxu0 0
        %539 = vmatmul.mubr.bf16.gmra.mrb[0].mxu0 %v490
        %v540 = vpop.f32.mrb[0].mxu0
        %v541 = vadd.f32 0.0, %v540
        %v542 = vpop.f32.mrb[0].mxu0
        %v543 = vpop.f32.mrb[0].mxu0
        %v544 = vadd.f32 0.0, %v543
        %v545 = vpop.f32.mrb[0].mxu0
        %546 = vmatprep.mubr.bf16.mxu0 0
        %547 = vmatmul.mubr.bf16.gmra.mrb[0].mxu0 %v493
        %v548 = vpop.f32.mrb[0].mxu0
        %v549 = vadd.f32 0.0, %v548
        %v550 = vpop.f32.mrb[0].mxu0
        %v551 = vpop.f32.mrb[0].mxu0
        %v552 = vadd.f32 0.0, %v551
        %v553 = vpop.f32.mrb[0].mxu0
        %554 = vmatprep.mubr.bf16.mxu0 0
        %555 = vmatmul.mubr.bf16.gmra.mrb[0].mxu0 %v496
        %v556 = vpop.f32.mrb[0].mxu0
        %v557 = vadd.f32 0.0, %v556
        %v558 = vpop.f32.mrb[0].mxu0
        %v559 = vpop.f32.mrb[0].mxu0
        %v560 = vadd.f32 0.0, %v559
        %v561 = vpop.f32.mrb[0].mxu0
        %562 = vdwg.mxu0
        %v563 = vadd.f32 %v334, %v533
        %v564 = vadd.f32 %v337, %v536
        %v565 = vadd.f32 %v342, %v541
        %v566 = vadd.f32 %v345, %v544
        %v567 = vadd.f32 %v350, %v549
        %v568 = vadd.f32 %v353, %v552
        %v569 = vadd.f32 %v358, %v557
        %v570 = vadd.f32 %v361, %v560
        %571 = vst [vmem:[%s218] sm:$0xff] %v563
        %572 = vst [vmem:[%s218 + $0x8] sm:$0xff] %v564
        %573 = vst [vmem:[%s218 + $0x10] sm:$0xff] %v565
        %574 = vst [vmem:[%s218 + $0x18] sm:$0xff] %v566
        %575 = vst [vmem:[%s218 + $0x20] sm:$0xff] %v567
        %576 = vst [vmem:[%s218 + $0x28] sm:$0xff] %v568
        %577 = vst [vmem:[%s218 + $0x30] sm:$0xff] %v569
        %578 = vst [vmem:[%s218 + $0x38] sm:$0xff] %v570
        %s579 = sand.u32 %s137, 1
        %s580 = scalar_lea.sflag [#allocation3], %s579
        %s581 = sand.u32 %s137, 1
        %s582 = smul.addr %s581, 64
        %s583 = scalar_lea.vmem [#allocation2], %s582
        // Predicated region
        $region41: #{tpu_custom_call.1} parent=39 // pred_check
          %p584 = pneg %p147
        $region42: #{tpu_custom_call.1} parent=39 // pred_check_branch
          %586 = sbr.rel (%p584) target = $region44
        $region43: #{tpu_custom_call.1} parent=39 // pred_region
          %s587 = smul.u32 8, %s19
          %s589 = ssub.s32 1024, 1024
          %590 = vsyncadd %s580, %s589
          %s591 = smul.addr %s587, 128
          %s592 = scalar_lea.hbm %s5, %s591
          %s593 = sshll.u32 %s583, 4
          %s594 = int_to_ptr.vmem [resolvable:$true] %s593
          %599 = dma.vmem_to_hbm [thread:$0]  %s594, 1024, %s592, %s580, 128, 128, 8
        $region44: #{tpu_custom_call.1} parent=39 // pred_fallthru
          _
      $region40: #{tpu_custom_call.1} parent=5 // pred_fallthru
        _
      %p600 = scmp.le.s32.totalorder 2, %s14
      // Predicated region
      $region45: #{tpu_custom_call.1} parent=5 // pred_check
        %p601 = pneg %p600
      $region46: #{tpu_custom_call.1} parent=5 // pred_check_branch
        %603 = sbr.rel (%p601) target = $region48
      $region47: #{tpu_custom_call.1} parent=5 // pred_region
        %s604 = ssub.s32 %s14, 2
        // Predicated region
        $region49: #{tpu_custom_call.1} parent=47 // pred_check
          %p605 = pneg %p153
        $region50: #{tpu_custom_call.1} parent=47 // pred_check_branch
          %607 = sbr.rel (%p605) target = $region52
        $region51: #{tpu_custom_call.1} parent=47 // pred_region
          %s608 = sand.u32 %s138, 1
          %s609 = scalar_lea.sflag [#allocation3], %s608
          %s610 = sand.u32 %s138, 1
          %s611 = smul.addr %s610, 64
          %s612 = scalar_lea.vmem [#allocation2], %s611
          %613 = dma.done %s609, 1024
        $region52: #{tpu_custom_call.1} parent=47 // pred_fallthru
          _
      $region48: #{tpu_custom_call.1} parent=5 // pred_fallthru
        _
    $region6: #{tpu_custom_call.1} parent=1 // loop_footer
      %s18 = sadd.s32 1, %s14
    $region7: #{tpu_custom_call.1} parent=1 // loop_footer_branch
      %13 = sbr.rel target = $region3
    $region8: #{tpu_custom_call.1} parent=1 // loop_exit
      _
    %614 = vsyncpa [#allocation3], 1
    %s615 = scalar_lea.sflag [#allocation3], 1
    %616 = vsyncpa %s615, 1

</llo_original>
